<compile_context>
chip_gen: v6e
topology: v6e:2x2x1
jax: 0.10.0
libtpu: 0.0.40
codegen_flags: <defaults>
</compile_context>

<pallas_src>
import jax
import jax.numpy as jnp
from jax.experimental import pallas as pl
from jax.experimental.pallas import tpu as pltpu

_LANE = 128


def _cdiv(a: int, b: int) -> int:
    return -(-a // b)


def _round_up(a: int, b: int) -> int:
    return _cdiv(a, b) * b


def _pick_rows(total_rows: int, n_batch: int, max_rows: int) -> int:
    """Row-block size: multiple of 32 (dense packed-uint8 sublanes) when
    possible, never larger than the array dim, split >= 2 ways when the batch
    is 1 so v7x megacore has work for both TensorCores.  Falls back to the
    full dim (exempt from the (8,128) rule) for tiny / non-8-aligned dims."""
    if total_rows <= 32 or total_rows % 8 != 0:
        return total_rows
    splits = 2 if n_batch == 1 else 1
    want = _round_up(_cdiv(total_rows, splits), 32)
    return max(8, min(want, max_rows, total_rows))


def _make_normalize_kernel(mean_scaled, inv_std, out_dtype):
    """Kernel with per-channel constants baked in at trace time."""
    n_ch = len(mean_scaled)

    def kernel(x_ref, o_ref):
        # x_ref / o_ref: (C, rows, lanes) block.  C < 4 -> unrolled.
        # Body math intentionally left simple: VPU work is hidden under DMA.
        for c in range(n_ch):
            xc = x_ref[c].astype(jnp.float32)
            o_ref[c] = ((xc - mean_scaled[c]) * inv_std[c]).astype(out_dtype)

    return kernel


class FlashAlbumentationsAdapter:
    """JAX/Pallas re-implementation of the PyTorch adapter with a
    deterministic Normalize(mean, std) as the wrapped albumentations
    transform, followed by ToTensorV2 (HWC -> CHW)."""

    TRANSFORM_INPUT_MAPPING = {"image": "input", "mask": "target"}

    def __init__(self, mean, std, max_pixel_value=255.0,
                 mapping: dict = None, image_key: str = "input",
                 rows_per_step: int = 2048, out_dtype=jnp.float32):
        mean = tuple(float(m) for m in mean)
        std = tuple(float(s) for s in std)
        self._C = len(mean)
        self._mean_scaled = tuple(m * float(max_pixel_value) for m in mean)
        self._inv_std = tuple(1.0 / (s * float(max_pixel_value)) for s in std)
        self._out_dtype = out_dtype
        self._kernel = _make_normalize_kernel(
            self._mean_scaled, self._inv_std, out_dtype)

        self._img_key = image_key
        if not mapping:
            mapping = self.TRANSFORM_INPUT_MAPPING
        self._mapping_rev = mapping
        self._mapping = {v: k for k, v in mapping.items()}

        # 2048 rows * 128 lanes = 256K px / channel / step: ~7.5 MiB
        # double-buffered (uint8 in + f32 out, C=3) -> safe on v5e's 16 MiB
        # default scoped VMEM and far under v7x's 64 MiB physical VMEM.
        self._rows_per_step = max(32, (int(rows_per_step) // 32) * 32)

        # jit the whole hot path (reshape glue + pallas_call) once per shape.
        self._normalize = jax.jit(self._normalize_impl)

    # ---- hot path: per-channel normalize inside one Pallas kernel ----------
    def _normalize_impl(self, x):
        squeeze = x.ndim == 3              # single CHW image
        if squeeze:
            x = x[None]
        N, C, H, W = x.shape
        assert C == self._C, "channel count must match mean/std"
        n_pix = H * W

        if n_pix % _LANE == 0:
            # Lane-dense folded layout: (N, C, n_rows, 128).  Reshapes are
            # free (contiguous); no pad, no slice.  Ragged last row-block is
            # a Pallas edge block whose overhanging writes are discarded.
            rows_dim = n_pix // _LANE
            lane_dim = _LANE
            t_rows = _pick_rows(rows_dim, N, self._rows_per_step)
            xk = x.reshape(N, C, rows_dim, lane_dim)
        else:
            # Native layout: tile full-width row blocks of the (H, W) plane.
            # Last block dim == full W (exempt from the 128 rule), so there is
            # no pad / slice / reshape at all; only VMEM lane padding (no
            # extra HBM traffic).
            rows_dim, lane_dim = H, W
            w_pad = _round_up(W, _LANE)
            budget = max(8, ((self._rows_per_step * _LANE) // w_pad) // 8 * 8)
            t_rows = _pick_rows(H, N, budget)
            xk = x

        grid = (N, _cdiv(rows_dim, t_rows))
        total = N * C * rows_dim * lane_dim
        bytes_accessed = total * (jnp.dtype(x.dtype).itemsize
                                  + jnp.dtype(self._out_dtype).itemsize)

        out = pl.pallas_call(
            self._kernel,
            out_shape=jax.ShapeDtypeStruct(
                (N, C, rows_dim, lane_dim), self._out_dtype),
            grid=grid,
            in_specs=[
                pl.BlockSpec((None, C, t_rows, lane_dim),
                             lambda n, i: (n, 0, i, 0)),
            ],
            out_specs=pl.BlockSpec((None, C, t_rows, lane_dim),
                                   lambda n, i: (n, 0, i, 0)),
            compiler_params=pltpu.CompilerParams(
                dimension_semantics=("parallel", "parallel")),
            cost_estimate=pl.CostEstimate(
                flops=3 * total, transcendentals=0,
                bytes_accessed=bytes_accessed),
        )(xk)

        out = out.reshape(N, C, H, W)      # no-op / free contiguous reshape
        if squeeze:
            out = out[0]
        return out

    def __call__(self, x):
        if isinstance(x, dict):
            x_ = {}
            for k in self._mapping:
                if k in x and k != self._img_key:
                    # masks pass through unchanged (ToTensorV2 with
                    # transpose_mask=False is identity here)
                    x_[self._mapping[k]] = x[k]
            if self._img_key in self._mapping and self._img_key in x:
                x_[self._mapping[self._img_key]] = self._normalize(
                    x[self._img_key])
            x = dict(x)
            x.update({self._mapping_rev.get(k, k): x_[k]
                      for k in self._mapping_rev if k in x_})
            return x
        # plain-tensor path: CHW (or NCHW batch) in, normalized float out
        return self._normalize(x)


if __name__ == "__main__":
    key = jax.random.PRNGKey(0)
    mean = (0.485, 0.456, 0.406)          # deterministic "ImageNet" Normalize
    std = (0.229, 0.224, 0.225)
    adapter = FlashAlbumentationsAdapter(mean=mean, std=std,
                                         max_pixel_value=255.0)

    def ref_norm(img):
        m = jnp.array(mean, jnp.float32) * 255.0
        s = jnp.array(std, jnp.float32) * 255.0
        return (img.astype(jnp.float32) - m[:, None, None]) / s[:, None, None]

    # batch of 2 small 3-channel images (C < 4 triggers the CHW->HWC permute
    # in the original _image_transform), 16x16 spatial, uint8 pixels
    x = jax.random.randint(key, (2, 3, 16, 16), 0, 256,
                           dtype=jnp.int32).astype(jnp.uint8)
    out = jax.block_until_ready(adapter(x))            # NCHW float32
    ref = jnp.stack([ref_norm(x[0]), ref_norm(x[1])])
    assert out.shape == (2, 3, 16, 16) and out.dtype == jnp.float32
    assert jnp.allclose(out, ref, atol=1e-4, rtol=1e-5)

    # single-image path (CHW in, CHW out)
    out1 = jax.block_until_ready(adapter(x[0]))
    assert out1.shape == (3, 16, 16)
    assert jnp.allclose(out1, ref[0], atol=1e-4, rtol=1e-5)

    # dict path (image + mask passthrough)
    d = {"input": x[0], "target": jnp.zeros((16, 16), jnp.int32)}
    d_out = adapter(d)
    jax.block_until_ready(d_out["input"])
    assert jnp.allclose(d_out["input"], ref[0], atol=1e-4, rtol=1e-5)
    assert d_out["target"].shape == (16, 16)

    # non-128-aligned spatial size -> native (H, W) tiling path (no pad/slice)
    k2, k3 = jax.random.split(key)
    x_odd = jax.random.randint(k2, (3, 20, 19), 0, 256,
                               dtype=jnp.int32).astype(jnp.uint8)
    out_odd = jax.block_until_ready(adapter(x_odd))
    assert out_odd.shape == (3, 20, 19)
    assert jnp.allclose(out_odd, ref_norm(x_odd), atol=1e-4, rtol=1e-5)

    # folded path with a ragged edge row-block (72 rows, 64-row blocks):
    # verifies overhanging edge-block writes are correctly discarded.
    x_edge = jax.random.randint(k3, (3, 72, 128), 0, 256,
                                dtype=jnp.int32).astype(jnp.uint8)
    out_edge = jax.block_until_ready(adapter(x_edge))
    assert out_edge.shape == (3, 72, 128)
    assert jnp.allclose(out_edge, ref_norm(x_edge), atol=1e-4, rtol=1e-5)

    # TODO(synk): non-deterministic albumentations augmentations (random
    # flips, crops, etc.) from the generic Compose are host-side and not
    # translated.
    print("KERNEL_OK")
</pallas_src>

<mosaic_0001>
module attributes {stable_mosaic.version = 11 : i64} {
  func.func @kernel(%arg0: i32, %arg1: i32, %arg2: memref<1x3x2x128xi8, #tpu.memory_space<vmem>>, %arg3: memref<1x3x2x128xf32, #tpu.memory_space<vmem>>) attributes {dimension_semantics = [#tpu.dimension_semantics<parallel>, #tpu.dimension_semantics<parallel>], iteration_bounds = array<i64: 2, 1>, scalar_prefetch = 0 : i64, scratch_operands = 0 : i64, tpu.core_type = #tpu.core_type<tc>, window_params = [{transform_indices = @transform_0, window_bounds = array<i64: 1, 3, 2, 128>}, {transform_indices = @transform_1, window_bounds = array<i64: 1, 3, 2, 128>}]} {
    %c0 = arith.constant 0 : index
    %c0_0 = arith.constant 0 : index
    %c0_1 = arith.constant 0 : index
    %c0_2 = arith.constant 0 : index
    %0 = vector.load %arg2[%c0, %c0_0, %c0_1, %c0_2] : memref<1x3x2x128xi8, #tpu.memory_space<vmem>>, vector<1x1x2x128xi8>
    %1 = vector.shape_cast %0 : vector<1x1x2x128xi8> to vector<2x128xi8>
    %2 = arith.uitofp %1 : vector<2x128xi8> to vector<2x128xf32>
    %cst = arith.constant 1.236750e+02 : f32
    %3 = vector.broadcast %cst : f32 to vector<2x128xf32>
    %4 = arith.subf %2, %3 : vector<2x128xf32>
    %cst_3 = arith.constant 0.0171247534 : f32
    %5 = vector.broadcast %cst_3 : f32 to vector<2x128xf32>
    %6 = arith.mulf %4, %5 : vector<2x128xf32>
    %c0_4 = arith.constant 0 : index
    %c0_5 = arith.constant 0 : index
    %c0_6 = arith.constant 0 : index
    %c0_7 = arith.constant 0 : index
    %7 = vector.load %arg3[%c0_4, %c0_5, %c0_6, %c0_7] : memref<1x3x2x128xf32, #tpu.memory_space<vmem>>, vector<1x1x2x128xf32>
    %8 = vector.shape_cast %7 : vector<1x1x2x128xf32> to vector<2x128xf32>
    %9 = vector.shape_cast %6 : vector<2x128xf32> to vector<1x1x2x128xf32>
    tpu.vector_store %arg3[%c0_4, %c0_5, %c0_6, %c0_7], %9 {strides = array<i32>} : memref<1x3x2x128xf32, #tpu.memory_space<vmem>>, vector<1x1x2x128xf32>,
    %c0_8 = arith.constant 0 : index
    %c1 = arith.constant 1 : index
    %c0_9 = arith.constant 0 : index
    %c0_10 = arith.constant 0 : index
    %10 = vector.load %arg2[%c0_8, %c1, %c0_9, %c0_10] : memref<1x3x2x128xi8, #tpu.memory_space<vmem>>, vector<1x1x2x128xi8>
    %11 = vector.shape_cast %10 : vector<1x1x2x128xi8> to vector<2x128xi8>
    %12 = arith.uitofp %11 : vector<2x128xi8> to vector<2x128xf32>
    %cst_11 = arith.constant 1.162800e+02 : f32
    %13 = vector.broadcast %cst_11 : f32 to vector<2x128xf32>
    %14 = arith.subf %12, %13 : vector<2x128xf32>
    %cst_12 = arith.constant 0.0175070036 : f32
    %15 = vector.broadcast %cst_12 : f32 to vector<2x128xf32>
    %16 = arith.mulf %14, %15 : vector<2x128xf32>
    %c0_13 = arith.constant 0 : index
    %c1_14 = arith.constant 1 : index
    %c0_15 = arith.constant 0 : index
    %c0_16 = arith.constant 0 : index
    %17 = vector.load %arg3[%c0_13, %c1_14, %c0_15, %c0_16] : memref<1x3x2x128xf32, #tpu.memory_space<vmem>>, vector<1x1x2x128xf32>
    %18 = vector.shape_cast %17 : vector<1x1x2x128xf32> to vector<2x128xf32>
    %19 = vector.shape_cast %16 : vector<2x128xf32> to vector<1x1x2x128xf32>
    tpu.vector_store %arg3[%c0_13, %c1_14, %c0_15, %c0_16], %19 {strides = array<i32>} : memref<1x3x2x128xf32, #tpu.memory_space<vmem>>, vector<1x1x2x128xf32>,
    %c0_17 = arith.constant 0 : index
    %c2 = arith.constant 2 : index
    %c0_18 = arith.constant 0 : index
    %c0_19 = arith.constant 0 : index
    %20 = vector.load %arg2[%c0_17, %c2, %c0_18, %c0_19] : memref<1x3x2x128xi8, #tpu.memory_space<vmem>>, vector<1x1x2x128xi8>
    %21 = vector.shape_cast %20 : vector<1x1x2x128xi8> to vector<2x128xi8>
    %22 = arith.uitofp %21 : vector<2x128xi8> to vector<2x128xf32>
    %cst_20 = arith.constant 1.035300e+02 : f32
    %23 = vector.broadcast %cst_20 : f32 to vector<2x128xf32>
    %24 = arith.subf %22, %23 : vector<2x128xf32>
    %cst_21 = arith.constant 0.0174291935 : f32
    %25 = vector.broadcast %cst_21 : f32 to vector<2x128xf32>
    %26 = arith.mulf %24, %25 : vector<2x128xf32>
    %c0_22 = arith.constant 0 : index
    %c2_23 = arith.constant 2 : index
    %c0_24 = arith.constant 0 : index
    %c0_25 = arith.constant 0 : index
    %27 = vector.load %arg3[%c0_22, %c2_23, %c0_24, %c0_25] : memref<1x3x2x128xf32, #tpu.memory_space<vmem>>, vector<1x1x2x128xf32>
    %28 = vector.shape_cast %27 : vector<1x1x2x128xf32> to vector<2x128xf32>
    %29 = vector.shape_cast %26 : vector<2x128xf32> to vector<1x1x2x128xf32>
    tpu.vector_store %arg3[%c0_22, %c2_23, %c0_24, %c0_25], %29 {strides = array<i32>} : memref<1x3x2x128xf32, #tpu.memory_space<vmem>>, vector<1x1x2x128xf32>,
    return
  }
  func.func @transform_0(%arg0: i32, %arg1: i32) -> (i32, i32, i32, i32) {
    %c0_i32 = arith.constant 0 : i32
    %c0_i32_0 = arith.constant 0 : i32
    %c0_i32_1 = arith.constant 0 : i32
    return %arg0, %c0_i32, %arg1, %c0_i32_0 : i32, i32, i32, i32
  }
  func.func @transform_1(%arg0: i32, %arg1: i32) -> (i32, i32, i32, i32) {
    %c0_i32 = arith.constant 0 : i32
    %c0_i32_0 = arith.constant 0 : i32
    %c0_i32_1 = arith.constant 0 : i32
    return %arg0, %c0_i32, %arg1, %c0_i32_0 : i32, i32, i32, i32
  }
}

</mosaic_0001>

<llo_original>
// kernel: _normalize_impl.1
$region0: #{_normalize_impl.1}
  #allocation0 [shape = 'u32[]', space=smem, size = 0x4, offset = 0x4, fixed_abs, tag = 'smem constant byte address 0x4 - core index']
  #allocation1 [shape = 'u32[144,128]{1,0:T(1,128)}', space=vmem, size = 0x12000, scoped, tag = 'internal scratch']
  %s0 = inlined_call_operand.vmem [shape: u8[2,3,2,128], index: 0, kind: input, shape index: {}]
  %s1 = inlined_call_operand.vmem [shape: f32[2,3,2,128], index: 1, kind: output, shape index: {}]
  %s2 = sld [smem:[#allocation0]]
  $region37: #{_normalize_impl.1} parent=0
    _
  %s4 = ssub.s32 1, %s2
  %s5 = scalar_select 0, %s4, %s2
  loop: start=0, step=1, limit=4
  $region2: #{_normalize_impl.1} parent=0 // loop_pre_header
    _
  $region3: #{_normalize_impl.1} parent=0 // loop_header
    %s7 = sphi 0, %s11
    %p8 = scmp.ge.s32.totalorder %s7, 4
    %s14 = sphi 0, %s26
    %s15 = sphi 0, %s22
    %s16 = sphi 0, %s14
    %s17 = sphi 0, %s15
    %s18 = sphi 0, %s16
    %s19 = sphi 0, %s17
    %s31 = sphi 0, %s33
    %s34 = sphi 0, %s31
    %s35 = sphi 0, %s34
    %s51 = sphi 0, %s35
    %s59 = sphi 0, %s61
    %s62 = sphi 0, %s59
    %s63 = sphi 0, %s62
    %s79 = sphi 0, %s63
  $region4: #{_normalize_impl.1} parent=0 // loop_header_branch
    %10 = sbr.rel (%p8) target = $region8
  $region5: #{_normalize_impl.1} parent=0 // loop_body
    %s12 = ssub.s32 %s7, 1
    %s13 = ssub.s32 %s7, 2
    %s20 = sadd.s32 1, %s15
    %p21 = scmp.ge.s32.totalorder %s20, 1
    %s22 = scalar_select %p21, 0, %s20
    %s23 = sadd.s32 1, %s14
    %s24 = scalar_select %p21, %s23, %s14
    %p25 = scmp.ge.s32.totalorder %s24, 2
    %s26 = scalar_select %p25, 0, %s24
    %s27 = ssub.s32 %s14, %s26
    %s28 = ssub.s32 %s15, %s22
    %s29 = sor.u32 %s27, %s28
    %p30 = scmp.eq.s32.totalorder %s29, 0
    %s32 = sadd.s32 %s31, 1
    %s33 = scalar_select %p30, %s31, %s32
    %p36 = pneg %p30
    %p37 = scmp.eq.s32.totalorder %s7, 1
    %p38 = por %p36, %p37
    %p39 = scmp.ne.s32.totalorder %s31, %s34
    %p40 = scmp.eq.s32.totalorder %s7, 0
    %p41 = por %p39, %p40
    %p42 = scmp.ne.s32.totalorder %s31, %s34
    %p43 = scmp.eq.s32.totalorder %s12, 1
    %p44 = por %p42, %p43
    %p45 = scmp.ne.s32.totalorder %s34, %s35
    %p46 = scmp.eq.s32.totalorder %s12, 0
    %p47 = por %p45, %p46
    %p48 = scmp.ne.s32.totalorder %s34, %s35
    %p49 = scmp.eq.s32.totalorder %s13, 1
    %p50 = por %p48, %p49
    %p52 = scmp.ne.s32.totalorder %s35, %s51
    %p53 = scmp.eq.s32.totalorder %s13, 0
    %p54 = por %p52, %p53
    %s55 = ssub.s32 %s14, %s26
    %s56 = ssub.s32 %s15, %s22
    %s57 = sor.u32 %s55, %s56
    %p58 = scmp.eq.s32.totalorder %s57, 0
    %s60 = sadd.s32 %s59, 1
    %s61 = scalar_select %p58, %s59, %s60
    %p64 = pneg %p58
    %p65 = scmp.eq.s32.totalorder %s7, 1
    %p66 = por %p64, %p65
    %p67 = scmp.ne.s32.totalorder %s59, %s62
    %p68 = scmp.eq.s32.totalorder %s7, 0
    %p69 = por %p67, %p68
    %p70 = scmp.ne.s32.totalorder %s59, %s62
    %p71 = scmp.eq.s32.totalorder %s12, 1
    %p72 = por %p70, %p71
    %p73 = scmp.ne.s32.totalorder %s62, %s63
    %p74 = scmp.eq.s32.totalorder %s12, 0
    %p75 = por %p73, %p74
    %p76 = scmp.ne.s32.totalorder %s62, %s63
    %p77 = scmp.eq.s32.totalorder %s13, 1
    %p78 = por %p76, %p77
    %p80 = scmp.ne.s32.totalorder %s63, %s79
    %p81 = scmp.eq.s32.totalorder %s13, 0
    %p82 = por %p80, %p81
    %p83 = scmp.le.s32.totalorder 1, %s7
    %p84 = scmp.lt.s32.totalorder %s7, 3
    %p85 = pnand %p83, %p84
    %p86 = pneg %p85
    // Predicated region
    $region9: #{_normalize_impl.1} parent=5 // pred_check
      _
    $region10: #{_normalize_impl.1} parent=5 // pred_check_branch
      %88 = sbr.rel (%p85) target = $region12
    $region11: #{_normalize_impl.1} parent=5 // pred_region
      %s89 = ssub.s32 %s7, 1
    $region12: #{_normalize_impl.1} parent=5 // pred_fallthru
      _
    %p90 = scmp.lt.s32.totalorder %s7, 2
    // Predicated region
    $region13: #{_normalize_impl.1} parent=5 // pred_check
      %p91 = pneg %p90
    $region14: #{_normalize_impl.1} parent=5 // pred_check_branch
      %93 = sbr.rel (%p91) target = $region16
    $region15: #{_normalize_impl.1} parent=5 // pred_region
      // Predicated region
      $region17: #{_normalize_impl.1} parent=15 // pred_check
        %p94 = pneg %p41
      $region18: #{_normalize_impl.1} parent=15 // pred_check_branch
        %96 = sbr.rel (%p94) target = $region20
      $region19: #{_normalize_impl.1} parent=15 // pred_region
        %p97 = scmp.lt.s32.totalorder %s14, 1
        %s98 = scalar_select %p97, %s14, 1
        %p99 = scmp.lt.s32.totalorder %s15, 0
        %s100 = scalar_select %p99, %s15, 0
        %s101 = smul.addr %s98, 3
        %s102 = sadd.s32 %s100, %s101
        %s103 = scalar_lea.vmem %s0, %s102
      $region20: #{_normalize_impl.1} parent=15 // pred_fallthru
        _
    $region16: #{_normalize_impl.1} parent=5 // pred_fallthru
      _
    %p104 = scmp.le.s32.totalorder 1, %s7
    %p105 = scmp.lt.s32.totalorder %s7, 3
    %p106 = pnand %p104, %p105
    %p107 = pneg %p106
    // Predicated region
    $region21: #{_normalize_impl.1} parent=5 // pred_check
      _
    $region22: #{_normalize_impl.1} parent=5 // pred_check_branch
      %109 = sbr.rel (%p106) target = $region24
    $region23: #{_normalize_impl.1} parent=5 // pred_region
      %s110 = ssub.s32 %s7, 1
      %p111 = scmp.lt.s32.totalorder %s16, 1
      %s112 = scalar_select %p111, %s16, 1
      %p113 = scmp.lt.s32.totalorder %s17, 0
      %s114 = scalar_select %p113, %s17, 0
      %s115 = smul.addr %s112, 3
      %s116 = sadd.s32 %s114, %s115
      %s117 = scalar_lea.vmem %s0, %s116
      %p118 = pneg %p47
      %p119 = pneg %p44
      %p120 = pneg %p75
      %p121 = pneg %p72
      %p122 = scmp.lt.s32.totalorder %s16, 1
      %s123 = scalar_select %p122, %s16, 1
      %p124 = scmp.lt.s32.totalorder %s17, 0
      %s125 = scalar_select %p124, %s17, 0
      %s126 = smul.addr %s123, 3
      %s127 = sadd.s32 %s125, %s126
      %s128 = smul.addr %s127, 2
      %s129 = scalar_lea.vmem %s1, %s128
      %p130 = scmp.lt.s32.totalorder %s16, 1
      %s131 = scalar_select %p130, %s16, 1
      %p132 = scmp.lt.s32.totalorder %s17, 0
      %s133 = scalar_select %p132, %s17, 0
      %s134 = smul.addr %s131, 3
      %s135 = sadd.s32 %s133, %s134
      %s136 = scalar_lea.vmem %s0, %s135
      %p137 = scmp.lt.s32.totalorder %s16, 1
      %s138 = scalar_select %p137, %s16, 1
      %p139 = scmp.lt.s32.totalorder %s17, 0
      %s140 = scalar_select %p139, %s17, 0
      %s141 = smul.addr %s138, 3
      %s142 = sadd.s32 %s140, %s141
      %s143 = smul.addr %s142, 2
      %s144 = scalar_lea.vmem %s1, %s143
      %v145 = vld [vmem:[%s136] sm:$0x1]
      %v146 = vunpack.c.0.s8 %v145
      %v147 = vand.u32 %v146, 255
      %v148 = vcvt.s32.f32 %v147
      %v149 = vsub.f32 %v148, 123.675
      %v150 = vmul.f32 %v149, 0.017124753
      %151 = vst [vmem:[%s144] sm:$0x3] %v150
      %s152 = scalar_lea.vmem %s136, 1
      %v153 = vld [vmem:[%s152] sm:$0x1]
      %v154 = vunpack.c.0.s8 %v153
      %v155 = vand.u32 %v154, 255
      %v156 = vcvt.s32.f32 %v155
      %v157 = vsub.f32 %v156, 116.28
      %v158 = vmul.f32 %v157, 0.017507004
      %s159 = scalar_lea.vmem %s144, 2
      %160 = vst [vmem:[%s159] sm:$0x3] %v158
      %s161 = scalar_lea.vmem %s136, 2
      %v162 = vld [vmem:[%s161] sm:$0x1]
      %v163 = vunpack.c.0.s8 %v162
      %v164 = vand.u32 %v163, 255
      %v165 = vcvt.s32.f32 %v164
      %v166 = vsub.f32 %v165, 103.53
      %v167 = vmul.f32 %v166, 0.017429193
      %s168 = scalar_lea.vmem %s144, 4
      %169 = vst [vmem:[%s168] sm:$0x3] %v167
      %p170 = scmp.lt.s32.totalorder %s16, 1
      %s171 = scalar_select %p170, %s16, 1
      %p172 = scmp.lt.s32.totalorder %s17, 0
      %s173 = scalar_select %p172, %s17, 0
      %s174 = smul.addr %s171, 3
      %s175 = sadd.s32 %s173, %s174
      %s176 = smul.addr %s175, 2
      %s177 = scalar_lea.vmem %s1, %s176
      // Predicated region
      $region25: #{_normalize_impl.1} parent=23 // pred_check
        %p178 = pneg %p72
      $region26: #{_normalize_impl.1} parent=23 // pred_check_branch
        %180 = sbr.rel (%p178) target = $region28
      $region27: #{_normalize_impl.1} parent=23 // pred_region
        _
      $region28: #{_normalize_impl.1} parent=23 // pred_fallthru
        _
    $region24: #{_normalize_impl.1} parent=5 // pred_fallthru
      _
    %p181 = scmp.le.s32.totalorder 2, %s7
    // Predicated region
    $region29: #{_normalize_impl.1} parent=5 // pred_check
      %p182 = pneg %p181
    $region30: #{_normalize_impl.1} parent=5 // pred_check_branch
      %184 = sbr.rel (%p182) target = $region32
    $region31: #{_normalize_impl.1} parent=5 // pred_region
      %s185 = ssub.s32 %s7, 2
      // Predicated region
      $region33: #{_normalize_impl.1} parent=31 // pred_check
        %p186 = pneg %p78
      $region34: #{_normalize_impl.1} parent=31 // pred_check_branch
        %188 = sbr.rel (%p186) target = $region36
      $region35: #{_normalize_impl.1} parent=31 // pred_region
        %p189 = scmp.lt.s32.totalorder %s18, 1
        %s190 = scalar_select %p189, %s18, 1
        %p191 = scmp.lt.s32.totalorder %s19, 0
        %s192 = scalar_select %p191, %s19, 0
        %s193 = smul.addr %s190, 3
        %s194 = sadd.s32 %s192, %s193
        %s195 = smul.addr %s194, 2
        %s196 = scalar_lea.vmem %s1, %s195
      $region36: #{_normalize_impl.1} parent=31 // pred_fallthru
        _
    $region32: #{_normalize_impl.1} parent=5 // pred_fallthru
      _
  $region6: #{_normalize_impl.1} parent=0 // loop_footer
    %s11 = sadd.s32 1, %s7
  $region7: #{_normalize_impl.1} parent=0 // loop_footer_branch
    %6 = sbr.rel target = $region3
  $region8: #{_normalize_impl.1} parent=0 // loop_exit
    _

</llo_original>
